<compile_context>
chip_gen: v5e
topology: v5e:2x2
jax: 0.10.0
libtpu: 0.0.40
codegen_flags: <defaults>
</compile_context>

<pallas_src>
import jax
import jax.numpy as jnp
from jax.experimental import pallas as pl
from jax.experimental.pallas import tpu as pltpu

IN_FEATURES = 32
OUT_FEATURES = 8
H1, H2 = 128, 256
COMPUTE_DTYPE = jnp.bfloat16    # MXU operand dtype; accumulation stays f32
MAX_TILE = 1024                 # per-tile VMEM is only a few MB even at 1024


# ---------------------------------------------------------------------------
# Kernel
# ---------------------------------------------------------------------------
def dqn3_kernel(x_ref, w1_ref, b1_ref, w2_ref, b2_ref, w3_ref, b3_ref,
                wo_ref, bo_ref, o_ref):
    cd = COMPUTE_DTYPE
    # fc1 + relu : bf16 operands on the MXU, f32 accumulate, f32 bias/relu (VPU)
    h = jnp.dot(x_ref[...].astype(cd), w1_ref[...],
                preferred_element_type=jnp.float32)
    h = jnp.maximum(h + b1_ref[...], 0.0)
    # fc2 + relu
    h = jnp.dot(h.astype(cd), w2_ref[...], preferred_element_type=jnp.float32)
    h = jnp.maximum(h + b2_ref[...], 0.0)
    # fc3 applied 5 times with shared weights (static unrolled loop so the
    # scheduler can overlap MXU drain with the previous layer's VPU relu).
    # Bias broadcast hoisted out of the loop: JAX does not CSE broadcast_in_dim.
    w3 = w3_ref[...]
    b3 = jnp.broadcast_to(b3_ref[...], h.shape)
    for _ in range(5):
        h = jnp.dot(h.astype(cd), w3, preferred_element_type=jnp.float32)
        h = jnp.maximum(h + b3, 0.0)
    # fc_out (no activation); store the narrow (TB, OUT_FEATURES) block
    # directly -- masked vst, but 16x less HBM writeback than a 128-wide slab.
    out = jnp.dot(h.astype(cd), wo_ref[...],
                  preferred_element_type=jnp.float32) + bo_ref[...]
    o_ref[...] = out.astype(o_ref.dtype)


# ---------------------------------------------------------------------------
# Wrapper
# ---------------------------------------------------------------------------
def _round_up(n, m):
    return ((n + m - 1) // m) * m


def _choose_tile(batch):
    # Tiny batch: single tile (rounded to a sublane multiple of 8).
    if batch < 32:
        return _round_up(max(batch, 1), 8)
    # Otherwise: as large a tile as possible while keeping >= 2 grid steps
    # (so the "parallel" axis can shard across v7x's two TensorCores),
    # capped at MAX_TILE rows per step.
    half = _round_up(pl.cdiv(batch, 2), 8)
    return min(MAX_TILE, half)


def dqn3_forward(x, params):
    """x: (B, IN_FEATURES) float32. params: dict of transposed weights/biases."""
    B = x.shape[0]
    TB = _choose_tile(B)
    grid = pl.cdiv(B, TB)   # ragged tail handled by Pallas edge-block masking

    cd = COMPUTE_DTYPE
    w1 = params["w1"].astype(cd)
    b1 = params["b1"].astype(jnp.float32)
    w2 = params["w2"].astype(cd)
    b2 = params["b2"].astype(jnp.float32)
    w3 = params["w3"].astype(cd)
    b3 = params["b3"].astype(jnp.float32)
    wo = params["wo"].astype(cd)
    bo = params["bo"].astype(jnp.float32)
    weights = (w1, b1, w2, b2, w3, b3, wo, bo)

    def const_spec(shape):
        rank = len(shape)
        return pl.BlockSpec(shape, lambda i: (0,) * rank)

    in_specs = [pl.BlockSpec((TB, IN_FEATURES), lambda i: (i, 0))]
    in_specs += [const_spec(w.shape) for w in weights]

    return pl.pallas_call(
        dqn3_kernel,
        out_shape=jax.ShapeDtypeStruct((B, OUT_FEATURES), jnp.float32),
        grid=(grid,),
        in_specs=in_specs,
        out_specs=pl.BlockSpec((TB, OUT_FEATURES), lambda i: (i, 0)),
        compiler_params=pltpu.CompilerParams(
            dimension_semantics=("parallel",)),
    )(x, *weights)


# ---------------------------------------------------------------------------
# Parameters & reference
# ---------------------------------------------------------------------------
def init_params(key):
    """Deterministic synthetic parameters (PyTorch-like uniform init bounds)."""
    ks = jax.random.split(key, 8)

    def linear(kw, kb, fan_in, fan_out):
        bound = 1.0 / jnp.sqrt(fan_in)
        # stored as (in, out) -> already transposed relative to nn.Linear.weight
        w = jax.random.uniform(kw, (fan_in, fan_out), jnp.float32, -bound, bound)
        b = jax.random.uniform(kb, (1, fan_out), jnp.float32, -bound, bound)
        return w, b

    w1, b1 = linear(ks[0], ks[1], IN_FEATURES, H1)
    w2, b2 = linear(ks[2], ks[3], H1, H2)
    w3, b3 = linear(ks[4], ks[5], H2, H2)
    wo, bo = linear(ks[6], ks[7], H2, OUT_FEATURES)
    return dict(w1=w1, b1=b1, w2=w2, b2=b2, w3=w3, b3=b3, wo=wo, bo=bo)


def reference_forward(x, p):
    relu = lambda v: jnp.maximum(v, 0.0)
    h = relu(x @ p["w1"] + p["b1"])
    h = relu(h @ p["w2"] + p["b2"])
    for _ in range(5):
        h = relu(h @ p["w3"] + p["b3"])
    return h @ p["wo"] + p["bo"]


# ---------------------------------------------------------------------------
# Self-test
# ---------------------------------------------------------------------------
if __name__ == "__main__":
    key = jax.random.PRNGKey(0)
    kx, kp = jax.random.split(key)
    params = init_params(kp)

    fwd = jax.jit(dqn3_forward)

    # Batch 64: TB=32, grid=2 -> both v7x TensorCores busy, exact tiling.
    x64 = jax.random.normal(kx, (64, IN_FEATURES), jnp.float32)
    out64 = jax.block_until_ready(fwd(x64, params))
    ref64 = reference_forward(x64, params)
    assert out64.shape == (64, OUT_FEATURES)
    # bf16 MXU operands through 7 chained matmuls -> loosened tolerance
    # vs. the pure-f32 reference (fine for DQN Q-values).
    assert jnp.allclose(out64, ref64, atol=5e-2, rtol=5e-2), float(
        jnp.max(jnp.abs(out64 - ref64)))

    # Batch 50: TB=32, grid=2 with a ragged tail -> exercises Pallas
    # edge-block masking (no wrapper-side pad / slice).
    x50 = x64[:50]
    out50 = jax.block_until_ready(fwd(x50, params))
    assert out50.shape == (50, OUT_FEATURES)
    assert jnp.allclose(out50, ref64[:50], atol=5e-2, rtol=5e-2)

    # Batch 10: tiny single-tile path (TB=16, grid=1, partial block).
    x10 = x64[:10]
    out10 = jax.block_until_ready(fwd(x10, params))
    assert out10.shape == (10, OUT_FEATURES)
    assert jnp.allclose(out10, ref64[:10], atol=5e-2, rtol=5e-2)

    print("KERNEL_OK")
</pallas_src>

<mosaic_0001>
module attributes {stable_mosaic.version = 11 : i64} {
  func.func @dqn3_kernel(%arg0: i32, %arg1: memref<32x32xf32, #tpu.memory_space<vmem>>, %arg2: memref<32x128xbf16, #tpu.memory_space<vmem>>, %arg3: memref<1x128xf32, #tpu.memory_space<vmem>>, %arg4: memref<128x256xbf16, #tpu.memory_space<vmem>>, %arg5: memref<1x256xf32, #tpu.memory_space<vmem>>, %arg6: memref<256x256xbf16, #tpu.memory_space<vmem>>, %arg7: memref<1x256xf32, #tpu.memory_space<vmem>>, %arg8: memref<256x8xbf16, #tpu.memory_space<vmem>>, %arg9: memref<1x8xf32, #tpu.memory_space<vmem>>, %arg10: memref<32x8xf32, #tpu.memory_space<vmem>>) attributes {dimension_semantics = [#tpu.dimension_semantics<parallel>], iteration_bounds = array<i64: 2>, scalar_prefetch = 0 : i64, scratch_operands = 0 : i64, tpu.core_type = #tpu.core_type<tc>, window_params = [{transform_indices = @transform_0, window_bounds = array<i64: 32, 32>}, {pipeline_mode = #tpu.pipeline_mode<synchronous>, transform_indices = @transform_1, window_bounds = array<i64: 32, 128>}, {pipeline_mode = #tpu.pipeline_mode<synchronous>, transform_indices = @transform_2, window_bounds = array<i64: 1, 128>}, {pipeline_mode = #tpu.pipeline_mode<synchronous>, transform_indices = @transform_3, window_bounds = array<i64: 128, 256>}, {pipeline_mode = #tpu.pipeline_mode<synchronous>, transform_indices = @transform_4, window_bounds = array<i64: 1, 256>}, {pipeline_mode = #tpu.pipeline_mode<synchronous>, transform_indices = @transform_5, window_bounds = array<i64: 256, 256>}, {pipeline_mode = #tpu.pipeline_mode<synchronous>, transform_indices = @transform_6, window_bounds = array<i64: 1, 256>}, {pipeline_mode = #tpu.pipeline_mode<synchronous>, transform_indices = @transform_7, window_bounds = array<i64: 256, 8>}, {pipeline_mode = #tpu.pipeline_mode<synchronous>, transform_indices = @transform_8, window_bounds = array<i64: 1, 8>}, {transform_indices = @transform_9, window_bounds = array<i64: 32, 8>}]} {
    %c0 = arith.constant 0 : index
    %c0_0 = arith.constant 0 : index
    %0 = vector.load %arg1[%c0, %c0_0] : memref<32x32xf32, #tpu.memory_space<vmem>>, vector<32x32xf32>
    %1 = arith.truncf %0 : vector<32x32xf32> to vector<32x32xbf16>
    %c0_1 = arith.constant 0 : index
    %c0_2 = arith.constant 0 : index
    %2 = vector.load %arg2[%c0_1, %c0_2] : memref<32x128xbf16, #tpu.memory_space<vmem>>, vector<32x128xbf16>
    %cst = arith.constant dense<0.000000e+00> : vector<32x128xf32>
    %3 = tpu.matmul %1, %2, %cst {dimension_numbers = #tpu.dot_dimension_numbers<[1], [0], [0], [1], [0, 0, 1, 1], [], []>} : vector<32x32xbf16>, vector<32x128xbf16>, vector<32x128xf32> -> vector<32x128xf32>
    %c0_3 = arith.constant 0 : index
    %c0_4 = arith.constant 0 : index
    %4 = vector.load %arg3[%c0_3, %c0_4] : memref<1x128xf32, #tpu.memory_space<vmem>>, vector<1x128xf32>
    %5 = vector.broadcast %4 : vector<1x128xf32> to vector<32x128xf32>
    %6 = arith.addf %3, %5 : vector<32x128xf32>
    %cst_5 = arith.constant 0.000000e+00 : f32
    %7 = vector.broadcast %cst_5 : f32 to vector<32x128xf32>
    %8 = arith.maximumf %6, %7 : vector<32x128xf32>
    %9 = arith.truncf %8 : vector<32x128xf32> to vector<32x128xbf16>
    %c0_6 = arith.constant 0 : index
    %c0_7 = arith.constant 0 : index
    %10 = vector.load %arg4[%c0_6, %c0_7] : memref<128x256xbf16, #tpu.memory_space<vmem>>, vector<128x256xbf16>
    %cst_8 = arith.constant dense<0.000000e+00> : vector<32x256xf32>
    %11 = tpu.matmul %9, %10, %cst_8 {dimension_numbers = #tpu.dot_dimension_numbers<[1], [0], [0], [1], [0, 0, 1, 1], [], []>} : vector<32x128xbf16>, vector<128x256xbf16>, vector<32x256xf32> -> vector<32x256xf32>
    %c0_9 = arith.constant 0 : index
    %c0_10 = arith.constant 0 : index
    %12 = vector.load %arg5[%c0_9, %c0_10] : memref<1x256xf32, #tpu.memory_space<vmem>>, vector<1x256xf32>
    %13 = vector.broadcast %12 : vector<1x256xf32> to vector<32x256xf32>
    %14 = arith.addf %11, %13 : vector<32x256xf32>
    %cst_11 = arith.constant 0.000000e+00 : f32
    %15 = vector.broadcast %cst_11 : f32 to vector<32x256xf32>
    %16 = arith.maximumf %14, %15 : vector<32x256xf32>
    %c0_12 = arith.constant 0 : index
    %c0_13 = arith.constant 0 : index
    %17 = vector.load %arg6[%c0_12, %c0_13] : memref<256x256xbf16, #tpu.memory_space<vmem>>, vector<256x256xbf16>
    %c0_14 = arith.constant 0 : index
    %c0_15 = arith.constant 0 : index
    %18 = vector.load %arg7[%c0_14, %c0_15] : memref<1x256xf32, #tpu.memory_space<vmem>>, vector<1x256xf32>
    %19 = vector.shape_cast %18 : vector<1x256xf32> to vector<1x256xf32>
    %20 = vector.broadcast %19 : vector<1x256xf32> to vector<32x256xf32>
    %21 = arith.truncf %16 : vector<32x256xf32> to vector<32x256xbf16>
    %cst_16 = arith.constant dense<0.000000e+00> : vector<32x256xf32>
    %22 = tpu.matmul %21, %17, %cst_16 {dimension_numbers = #tpu.dot_dimension_numbers<[1], [0], [0], [1], [0, 0, 1, 1], [], []>} : vector<32x256xbf16>, vector<256x256xbf16>, vector<32x256xf32> -> vector<32x256xf32>
    %23 = arith.addf %22, %20 : vector<32x256xf32>
    %cst_17 = arith.constant 0.000000e+00 : f32
    %24 = vector.broadcast %cst_17 : f32 to vector<32x256xf32>
    %25 = arith.maximumf %23, %24 : vector<32x256xf32>
    %26 = arith.truncf %25 : vector<32x256xf32> to vector<32x256xbf16>
    %cst_18 = arith.constant dense<0.000000e+00> : vector<32x256xf32>
    %27 = tpu.matmul %26, %17, %cst_18 {dimension_numbers = #tpu.dot_dimension_numbers<[1], [0], [0], [1], [0, 0, 1, 1], [], []>} : vector<32x256xbf16>, vector<256x256xbf16>, vector<32x256xf32> -> vector<32x256xf32>
    %28 = arith.addf %27, %20 : vector<32x256xf32>
    %cst_19 = arith.constant 0.000000e+00 : f32
    %29 = vector.broadcast %cst_19 : f32 to vector<32x256xf32>
    %30 = arith.maximumf %28, %29 : vector<32x256xf32>
    %31 = arith.truncf %30 : vector<32x256xf32> to vector<32x256xbf16>
    %cst_20 = arith.constant dense<0.000000e+00> : vector<32x256xf32>
    %32 = tpu.matmul %31, %17, %cst_20 {dimension_numbers = #tpu.dot_dimension_numbers<[1], [0], [0], [1], [0, 0, 1, 1], [], []>} : vector<32x256xbf16>, vector<256x256xbf16>, vector<32x256xf32> -> vector<32x256xf32>
    %33 = arith.addf %32, %20 : vector<32x256xf32>
    %cst_21 = arith.constant 0.000000e+00 : f32
    %34 = vector.broadcast %cst_21 : f32 to vector<32x256xf32>
    %35 = arith.maximumf %33, %34 : vector<32x256xf32>
    %36 = arith.truncf %35 : vector<32x256xf32> to vector<32x256xbf16>
    %cst_22 = arith.constant dense<0.000000e+00> : vector<32x256xf32>
    %37 = tpu.matmul %36, %17, %cst_22 {dimension_numbers = #tpu.dot_dimension_numbers<[1], [0], [0], [1], [0, 0, 1, 1], [], []>} : vector<32x256xbf16>, vector<256x256xbf16>, vector<32x256xf32> -> vector<32x256xf32>
    %38 = arith.addf %37, %20 : vector<32x256xf32>
    %cst_23 = arith.constant 0.000000e+00 : f32
    %39 = vector.broadcast %cst_23 : f32 to vector<32x256xf32>
    %40 = arith.maximumf %38, %39 : vector<32x256xf32>
    %41 = arith.truncf %40 : vector<32x256xf32> to vector<32x256xbf16>
    %cst_24 = arith.constant dense<0.000000e+00> : vector<32x256xf32>
    %42 = tpu.matmul %41, %17, %cst_24 {dimension_numbers = #tpu.dot_dimension_numbers<[1], [0], [0], [1], [0, 0, 1, 1], [], []>} : vector<32x256xbf16>, vector<256x256xbf16>, vector<32x256xf32> -> vector<32x256xf32>
    %43 = arith.addf %42, %20 : vector<32x256xf32>
    %cst_25 = arith.constant 0.000000e+00 : f32
    %44 = vector.broadcast %cst_25 : f32 to vector<32x256xf32>
    %45 = arith.maximumf %43, %44 : vector<32x256xf32>
    %46 = arith.truncf %45 : vector<32x256xf32> to vector<32x256xbf16>
    %c0_26 = arith.constant 0 : index
    %c0_27 = arith.constant 0 : index
    %47 = vector.load %arg8[%c0_26, %c0_27] : memref<256x8xbf16, #tpu.memory_space<vmem>>, vector<256x8xbf16>
    %cst_28 = arith.constant dense<0.000000e+00> : vector<32x8xf32>
    %48 = tpu.matmul %46, %47, %cst_28 {dimension_numbers = #tpu.dot_dimension_numbers<[1], [0], [0], [1], [0, 0, 1, 1], [], []>} : vector<32x256xbf16>, vector<256x8xbf16>, vector<32x8xf32> -> vector<32x8xf32>
    %c0_29 = arith.constant 0 : index
    %c0_30 = arith.constant 0 : index
    %49 = vector.load %arg9[%c0_29, %c0_30] : memref<1x8xf32, #tpu.memory_space<vmem>>, vector<1x8xf32>
    %50 = vector.broadcast %49 : vector<1x8xf32> to vector<32x8xf32>
    %51 = arith.addf %48, %50 : vector<32x8xf32>
    %c0_31 = arith.constant 0 : index
    %c0_32 = arith.constant 0 : index
    %52 = vector.load %arg10[%c0_31, %c0_32] : memref<32x8xf32, #tpu.memory_space<vmem>>, vector<32x8xf32>
    tpu.vector_store %arg10[%c0_31, %c0_32], %51 {strides = array<i32>} : memref<32x8xf32, #tpu.memory_space<vmem>>, vector<32x8xf32>,
    return
  }
  func.func @transform_0(%arg0: i32) -> (i32, i32) {
    %c0_i32 = arith.constant 0 : i32
    %c0_i32_0 = arith.constant 0 : i32
    return %arg0, %c0_i32 : i32, i32
  }
  func.func @transform_1(%arg0: i32) -> (i32, i32) {
    %c0_i32 = arith.constant 0 : i32
    %c0_i32_0 = arith.constant 0 : i32
    %c0_i32_1 = arith.constant 0 : i32
    return %c0_i32, %c0_i32_0 : i32, i32
  }
  func.func @transform_2(%arg0: i32) -> (i32, i32) {
    %c0_i32 = arith.constant 0 : i32
    %c0_i32_0 = arith.constant 0 : i32
    %c0_i32_1 = arith.constant 0 : i32
    return %c0_i32, %c0_i32_0 : i32, i32
  }
  func.func @transform_3(%arg0: i32) -> (i32, i32) {
    %c0_i32 = arith.constant 0 : i32
    %c0_i32_0 = arith.constant 0 : i32
    %c0_i32_1 = arith.constant 0 : i32
    return %c0_i32, %c0_i32_0 : i32, i32
  }
  func.func @transform_4(%arg0: i32) -> (i32, i32) {
    %c0_i32 = arith.constant 0 : i32
    %c0_i32_0 = arith.constant 0 : i32
    %c0_i32_1 = arith.constant 0 : i32
    return %c0_i32, %c0_i32_0 : i32, i32
  }
  func.func @transform_5(%arg0: i32) -> (i32, i32) {
    %c0_i32 = arith.constant 0 : i32
    %c0_i32_0 = arith.constant 0 : i32
    %c0_i32_1 = arith.constant 0 : i32
    return %c0_i32, %c0_i32_0 : i32, i32
  }
  func.func @transform_6(%arg0: i32) -> (i32, i32) {
    %c0_i32 = arith.constant 0 : i32
    %c0_i32_0 = arith.constant 0 : i32
    %c0_i32_1 = arith.constant 0 : i32
    return %c0_i32, %c0_i32_0 : i32, i32
  }
  func.func @transform_7(%arg0: i32) -> (i32, i32) {
    %c0_i32 = arith.constant 0 : i32
    %c0_i32_0 = arith.constant 0 : i32
    %c0_i32_1 = arith.constant 0 : i32
    return %c0_i32, %c0_i32_0 : i32, i32
  }
  func.func @transform_8(%arg0: i32) -> (i32, i32) {
    %c0_i32 = arith.constant 0 : i32
    %c0_i32_0 = arith.constant 0 : i32
    %c0_i32_1 = arith.constant 0 : i32
    return %c0_i32, %c0_i32_0 : i32, i32
  }
  func.func @transform_9(%arg0: i32) -> (i32, i32) {
    %c0_i32 = arith.constant 0 : i32
    %c0_i32_0 = arith.constant 0 : i32
    return %arg0, %c0_i32 : i32, i32
  }
}

</mosaic_0001>

<llo_original>
// kernel: dqn3_forward.1
$region0: #{dqn3_forward.1}
  #allocation0 [shape = 'u32[]', space=smem, size = 0x4, offset = 0x4, fixed_abs, tag = 'smem constant byte address 0x4 - core index']
  #allocation1 [shape = 'u32[72,128]{1,0:T(1,128)}', space=vmem, size = 0x9000, scoped, tag = 'internal scratch']
  %s0 = inlined_call_operand.vmem [shape: f32[64,32], index: 0, kind: input, shape index: {}]
  %s1 = inlined_call_operand.vmem [shape: bf16[32,128], index: 1, kind: input, shape index: {}]
  %s2 = inlined_call_operand.vmem [shape: f32[1,128], index: 2, kind: input, shape index: {}]
  %s3 = inlined_call_operand.vmem [shape: bf16[128,256], index: 3, kind: input, shape index: {}]
  %s4 = inlined_call_operand.vmem [shape: f32[1,256], index: 4, kind: input, shape index: {}]
  %s5 = inlined_call_operand.vmem [shape: bf16[256,256], index: 5, kind: input, shape index: {}]
  %s6 = inlined_call_operand.vmem [shape: f32[1,256], index: 6, kind: input, shape index: {}]
  %s7 = inlined_call_operand.vmem [shape: bf16[256,8], index: 7, kind: input, shape index: {}]
  %s8 = inlined_call_operand.vmem [shape: f32[1,8], index: 8, kind: input, shape index: {}]
  %s9 = inlined_call_operand.vmem [shape: f32[64,8], index: 9, kind: output, shape index: {}]
  %s10 = sld [smem:[#allocation0]]
  $region69: #{dqn3_forward.1} parent=0
    _
  %s12 = ssub.s32 1, %s10
  %s13 = scalar_select 0, %s12, %s10
  loop: start=0, step=1, limit=4
  $region2: #{dqn3_forward.1} parent=0 // loop_pre_header
    _
  $region3: #{dqn3_forward.1} parent=0 // loop_header
    %s15 = sphi 0, %s19
    %p16 = scmp.ge.s32.totalorder %s15, 4
    %s25 = sphi 0, %s27
    %s28 = sphi 0, %s25
    %s29 = sphi 0, %s28
    %s45 = sphi 0, %s29
    %s49 = sphi 0, %s49
    %s51 = sphi 0, %s49
    %s52 = sphi 0, %s51
    %s66 = sphi 0, %s52
    %s70 = sphi 0, %s70
    %s72 = sphi 0, %s70
    %s73 = sphi 0, %s72
    %s87 = sphi 0, %s73
    %s91 = sphi 0, %s91
    %s93 = sphi 0, %s91
    %s94 = sphi 0, %s93
    %s108 = sphi 0, %s94
    %s112 = sphi 0, %s112
    %s114 = sphi 0, %s112
    %s115 = sphi 0, %s114
    %s129 = sphi 0, %s115
    %s133 = sphi 0, %s133
    %s135 = sphi 0, %s133
    %s136 = sphi 0, %s135
    %s150 = sphi 0, %s136
    %s154 = sphi 0, %s154
    %s156 = sphi 0, %s154
    %s157 = sphi 0, %s156
    %s171 = sphi 0, %s157
    %s175 = sphi 0, %s175
    %s177 = sphi 0, %s175
    %s178 = sphi 0, %s177
    %s192 = sphi 0, %s178
    %s196 = sphi 0, %s196
    %s198 = sphi 0, %s196
    %s199 = sphi 0, %s198
    %s213 = sphi 0, %s199
    %s219 = sphi 0, %s221
    %s222 = sphi 0, %s219
    %s223 = sphi 0, %s222
    %s239 = sphi 0, %s223
  $region4: #{dqn3_forward.1} parent=0 // loop_header_branch
    %18 = sbr.rel (%p16) target = $region8
  $region5: #{dqn3_forward.1} parent=0 // loop_body
    %s20 = ssub.s32 %s15, 1
    %s21 = ssub.s32 %s15, 2
    %s22 = sadd.s32 %s15, 1
    %s23 = ssub.s32 %s15, %s22
    %p24 = scmp.eq.s32.totalorder %s23, 0
    %s26 = sadd.s32 %s25, 1
    %s27 = scalar_select %p24, %s25, %s26
    %p30 = pneg %p24
    %p31 = scmp.eq.s32.totalorder %s15, 1
    %p32 = por %p30, %p31
    %p33 = scmp.ne.s32.totalorder %s25, %s28
    %p34 = scmp.eq.s32.totalorder %s15, 0
    %p35 = por %p33, %p34
    %p36 = scmp.ne.s32.totalorder %s25, %s28
    %p37 = scmp.eq.s32.totalorder %s20, 1
    %p38 = por %p36, %p37
    %p39 = scmp.ne.s32.totalorder %s28, %s29
    %p40 = scmp.eq.s32.totalorder %s20, 0
    %p41 = por %p39, %p40
    %p42 = scmp.ne.s32.totalorder %s28, %s29
    %p43 = scmp.eq.s32.totalorder %s21, 1
    %p44 = por %p42, %p43
    %p46 = scmp.ne.s32.totalorder %s29, %s45
    %p47 = scmp.eq.s32.totalorder %s21, 0
    %p48 = por %p46, %p47
    %s50 = sadd.s32 %s49, 1
    %p53 = scmp.eq.s32.totalorder %s15, 1
    %p54 = scmp.ne.s32.totalorder %s49, %s51
    %p55 = scmp.eq.s32.totalorder %s15, 0
    %p56 = por %p54, %p55
    %p57 = scmp.ne.s32.totalorder %s49, %s51
    %p58 = scmp.eq.s32.totalorder %s20, 1
    %p59 = por %p57, %p58
    %p60 = scmp.ne.s32.totalorder %s51, %s52
    %p61 = scmp.eq.s32.totalorder %s20, 0
    %p62 = por %p60, %p61
    %p63 = scmp.ne.s32.totalorder %s51, %s52
    %p64 = scmp.eq.s32.totalorder %s21, 1
    %p65 = por %p63, %p64
    %p67 = scmp.ne.s32.totalorder %s52, %s66
    %p68 = scmp.eq.s32.totalorder %s21, 0
    %p69 = por %p67, %p68
    %s71 = sadd.s32 %s70, 1
    %p74 = scmp.eq.s32.totalorder %s15, 1
    %p75 = scmp.ne.s32.totalorder %s70, %s72
    %p76 = scmp.eq.s32.totalorder %s15, 0
    %p77 = por %p75, %p76
    %p78 = scmp.ne.s32.totalorder %s70, %s72
    %p79 = scmp.eq.s32.totalorder %s20, 1
    %p80 = por %p78, %p79
    %p81 = scmp.ne.s32.totalorder %s72, %s73
    %p82 = scmp.eq.s32.totalorder %s20, 0
    %p83 = por %p81, %p82
    %p84 = scmp.ne.s32.totalorder %s72, %s73
    %p85 = scmp.eq.s32.totalorder %s21, 1
    %p86 = por %p84, %p85
    %p88 = scmp.ne.s32.totalorder %s73, %s87
    %p89 = scmp.eq.s32.totalorder %s21, 0
    %p90 = por %p88, %p89
    %s92 = sadd.s32 %s91, 1
    %p95 = scmp.eq.s32.totalorder %s15, 1
    %p96 = scmp.ne.s32.totalorder %s91, %s93
    %p97 = scmp.eq.s32.totalorder %s15, 0
    %p98 = por %p96, %p97
    %p99 = scmp.ne.s32.totalorder %s91, %s93
    %p100 = scmp.eq.s32.totalorder %s20, 1
    %p101 = por %p99, %p100
    %p102 = scmp.ne.s32.totalorder %s93, %s94
    %p103 = scmp.eq.s32.totalorder %s20, 0
    %p104 = por %p102, %p103
    %p105 = scmp.ne.s32.totalorder %s93, %s94
    %p106 = scmp.eq.s32.totalorder %s21, 1
    %p107 = por %p105, %p106
    %p109 = scmp.ne.s32.totalorder %s94, %s108
    %p110 = scmp.eq.s32.totalorder %s21, 0
    %p111 = por %p109, %p110
    %s113 = sadd.s32 %s112, 1
    %p116 = scmp.eq.s32.totalorder %s15, 1
    %p117 = scmp.ne.s32.totalorder %s112, %s114
    %p118 = scmp.eq.s32.totalorder %s15, 0
    %p119 = por %p117, %p118
    %p120 = scmp.ne.s32.totalorder %s112, %s114
    %p121 = scmp.eq.s32.totalorder %s20, 1
    %p122 = por %p120, %p121
    %p123 = scmp.ne.s32.totalorder %s114, %s115
    %p124 = scmp.eq.s32.totalorder %s20, 0
    %p125 = por %p123, %p124
    %p126 = scmp.ne.s32.totalorder %s114, %s115
    %p127 = scmp.eq.s32.totalorder %s21, 1
    %p128 = por %p126, %p127
    %p130 = scmp.ne.s32.totalorder %s115, %s129
    %p131 = scmp.eq.s32.totalorder %s21, 0
    %p132 = por %p130, %p131
    %s134 = sadd.s32 %s133, 1
    %p137 = scmp.eq.s32.totalorder %s15, 1
    %p138 = scmp.ne.s32.totalorder %s133, %s135
    %p139 = scmp.eq.s32.totalorder %s15, 0
    %p140 = por %p138, %p139
    %p141 = scmp.ne.s32.totalorder %s133, %s135
    %p142 = scmp.eq.s32.totalorder %s20, 1
    %p143 = por %p141, %p142
    %p144 = scmp.ne.s32.totalorder %s135, %s136
    %p145 = scmp.eq.s32.totalorder %s20, 0
    %p146 = por %p144, %p145
    %p147 = scmp.ne.s32.totalorder %s135, %s136
    %p148 = scmp.eq.s32.totalorder %s21, 1
    %p149 = por %p147, %p148
    %p151 = scmp.ne.s32.totalorder %s136, %s150
    %p152 = scmp.eq.s32.totalorder %s21, 0
    %p153 = por %p151, %p152
    %s155 = sadd.s32 %s154, 1
    %p158 = scmp.eq.s32.totalorder %s15, 1
    %p159 = scmp.ne.s32.totalorder %s154, %s156
    %p160 = scmp.eq.s32.totalorder %s15, 0
    %p161 = por %p159, %p160
    %p162 = scmp.ne.s32.totalorder %s154, %s156
    %p163 = scmp.eq.s32.totalorder %s20, 1
    %p164 = por %p162, %p163
    %p165 = scmp.ne.s32.totalorder %s156, %s157
    %p166 = scmp.eq.s32.totalorder %s20, 0
    %p167 = por %p165, %p166
    %p168 = scmp.ne.s32.totalorder %s156, %s157
    %p169 = scmp.eq.s32.totalorder %s21, 1
    %p170 = por %p168, %p169
    %p172 = scmp.ne.s32.totalorder %s157, %s171
    %p173 = scmp.eq.s32.totalorder %s21, 0
    %p174 = por %p172, %p173
    %s176 = sadd.s32 %s175, 1
    %p179 = scmp.eq.s32.totalorder %s15, 1
    %p180 = scmp.ne.s32.totalorder %s175, %s177
    %p181 = scmp.eq.s32.totalorder %s15, 0
    %p182 = por %p180, %p181
    %p183 = scmp.ne.s32.totalorder %s175, %s177
    %p184 = scmp.eq.s32.totalorder %s20, 1
    %p185 = por %p183, %p184
    %p186 = scmp.ne.s32.totalorder %s177, %s178
    %p187 = scmp.eq.s32.totalorder %s20, 0
    %p188 = por %p186, %p187
    %p189 = scmp.ne.s32.totalorder %s177, %s178
    %p190 = scmp.eq.s32.totalorder %s21, 1
    %p191 = por %p189, %p190
    %p193 = scmp.ne.s32.totalorder %s178, %s192
    %p194 = scmp.eq.s32.totalorder %s21, 0
    %p195 = por %p193, %p194
    %s197 = sadd.s32 %s196, 1
    %p200 = scmp.eq.s32.totalorder %s15, 1
    %p201 = scmp.ne.s32.totalorder %s196, %s198
    %p202 = scmp.eq.s32.totalorder %s15, 0
    %p203 = por %p201, %p202
    %p204 = scmp.ne.s32.totalorder %s196, %s198
    %p205 = scmp.eq.s32.totalorder %s20, 1
    %p206 = por %p204, %p205
    %p207 = scmp.ne.s32.totalorder %s198, %s199
    %p208 = scmp.eq.s32.totalorder %s20, 0
    %p209 = por %p207, %p208
    %p210 = scmp.ne.s32.totalorder %s198, %s199
    %p211 = scmp.eq.s32.totalorder %s21, 1
    %p212 = por %p210, %p211
    %p214 = scmp.ne.s32.totalorder %s199, %s213
    %p215 = scmp.eq.s32.totalorder %s21, 0
    %p216 = por %p214, %p215
    %s217 = ssub.s32 %s15, %s22
    %p218 = scmp.eq.s32.totalorder %s217, 0
    %s220 = sadd.s32 %s219, 1
    %s221 = scalar_select %p218, %s219, %s220
    %p224 = pneg %p218
    %p225 = scmp.eq.s32.totalorder %s15, 1
    %p226 = por %p224, %p225
    %p227 = scmp.ne.s32.totalorder %s219, %s222
    %p228 = scmp.eq.s32.totalorder %s15, 0
    %p229 = por %p227, %p228
    %p230 = scmp.ne.s32.totalorder %s219, %s222
    %p231 = scmp.eq.s32.totalorder %s20, 1
    %p232 = por %p230, %p231
    %p233 = scmp.ne.s32.totalorder %s222, %s223
    %p234 = scmp.eq.s32.totalorder %s20, 0
    %p235 = por %p233, %p234
    %p236 = scmp.ne.s32.totalorder %s222, %s223
    %p237 = scmp.eq.s32.totalorder %s21, 1
    %p238 = por %p236, %p237
    %p240 = scmp.ne.s32.totalorder %s223, %s239
    %p241 = scmp.eq.s32.totalorder %s21, 0
    %p242 = por %p240, %p241
    %p243 = scmp.le.s32.totalorder 1, %s15
    %p244 = scmp.lt.s32.totalorder %s15, 3
    %p245 = pnand %p243, %p244
    %p246 = pneg %p245
    // Predicated region
    $region9: #{dqn3_forward.1} parent=5 // pred_check
      _
    $region10: #{dqn3_forward.1} parent=5 // pred_check_branch
      %248 = sbr.rel (%p245) target = $region12
    $region11: #{dqn3_forward.1} parent=5 // pred_region
      %s249 = ssub.s32 %s15, 1
      // Predicated region
      $region13: #{dqn3_forward.1} parent=11 // pred_check
        %p250 = pneg %p62
      $region14: #{dqn3_forward.1} parent=11 // pred_check_branch
        %252 = sbr.rel (%p250) target = $region16
      $region15: #{dqn3_forward.1} parent=11 // pred_region
        _
      $region16: #{dqn3_forward.1} parent=11 // pred_fallthru
        _
      // Predicated region
      $region17: #{dqn3_forward.1} parent=11 // pred_check
        %p253 = pneg %p83
      $region18: #{dqn3_forward.1} parent=11 // pred_check_branch
        %255 = sbr.rel (%p253) target = $region20
      $region19: #{dqn3_forward.1} parent=11 // pred_region
        _
      $region20: #{dqn3_forward.1} parent=11 // pred_fallthru
        _
      // Predicated region
      $region21: #{dqn3_forward.1} parent=11 // pred_check
        %p256 = pneg %p104
      $region22: #{dqn3_forward.1} parent=11 // pred_check_branch
        %258 = sbr.rel (%p256) target = $region24
      $region23: #{dqn3_forward.1} parent=11 // pred_region
        _
      $region24: #{dqn3_forward.1} parent=11 // pred_fallthru
        _
      // Predicated region
      $region25: #{dqn3_forward.1} parent=11 // pred_check
        %p259 = pneg %p125
      $region26: #{dqn3_forward.1} parent=11 // pred_check_branch
        %261 = sbr.rel (%p259) target = $region28
      $region27: #{dqn3_forward.1} parent=11 // pred_region
        _
      $region28: #{dqn3_forward.1} parent=11 // pred_fallthru
        _
      // Predicated region
      $region29: #{dqn3_forward.1} parent=11 // pred_check
        %p262 = pneg %p146
      $region30: #{dqn3_forward.1} parent=11 // pred_check_branch
        %264 = sbr.rel (%p262) target = $region32
      $region31: #{dqn3_forward.1} parent=11 // pred_region
        _
      $region32: #{dqn3_forward.1} parent=11 // pred_fallthru
        _
      // Predicated region
      $region33: #{dqn3_forward.1} parent=11 // pred_check
        %p265 = pneg %p167
      $region34: #{dqn3_forward.1} parent=11 // pred_check_branch
        %267 = sbr.rel (%p265) target = $region36
      $region35: #{dqn3_forward.1} parent=11 // pred_region
        _
      $region36: #{dqn3_forward.1} parent=11 // pred_fallthru
        _
      // Predicated region
      $region37: #{dqn3_forward.1} parent=11 // pred_check
        %p268 = pneg %p188
      $region38: #{dqn3_forward.1} parent=11 // pred_check_branch
        %270 = sbr.rel (%p268) target = $region40
      $region39: #{dqn3_forward.1} parent=11 // pred_region
        _
      $region40: #{dqn3_forward.1} parent=11 // pred_fallthru
        _
      // Predicated region
      $region41: #{dqn3_forward.1} parent=11 // pred_check
        %p271 = pneg %p209
      $region42: #{dqn3_forward.1} parent=11 // pred_check_branch
        %273 = sbr.rel (%p271) target = $region44
      $region43: #{dqn3_forward.1} parent=11 // pred_region
        _
      $region44: #{dqn3_forward.1} parent=11 // pred_fallthru
        _
    $region12: #{dqn3_forward.1} parent=5 // pred_fallthru
      _
    %p274 = scmp.lt.s32.totalorder %s15, 2
    // Predicated region
    $region45: #{dqn3_forward.1} parent=5 // pred_check
      %p275 = pneg %p274
    $region46: #{dqn3_forward.1} parent=5 // pred_check_branch
      %277 = sbr.rel (%p275) target = $region48
    $region47: #{dqn3_forward.1} parent=5 // pred_region
      // Predicated region
      $region49: #{dqn3_forward.1} parent=47 // pred_check
        %p278 = pneg %p35
      $region50: #{dqn3_forward.1} parent=47 // pred_check_branch
        %280 = sbr.rel (%p278) target = $region52
      $region51: #{dqn3_forward.1} parent=47 // pred_region
        %s281 = smul.u32 4, %s15
        %p282 = scmp.lt.s32.totalorder %s281, 7
        %s283 = scalar_select %p282, %s281, 7
        %s284 = smul.addr %s283, 8
        %s285 = scalar_lea.vmem %s0, %s284
        %s286 = smul.u32 4, %s15
      $region52: #{dqn3_forward.1} parent=47 // pred_fallthru
        _
    $region48: #{dqn3_forward.1} parent=5 // pred_fallthru
      _
    %p287 = scmp.le.s32.totalorder 1, %s15
    %p288 = scmp.lt.s32.totalorder %s15, 3
    %p289 = pnand %p287, %p288
    %p290 = pneg %p289
    // Predicated region
    $region53: #{dqn3_forward.1} parent=5 // pred_check
      _
    $region54: #{dqn3_forward.1} parent=5 // pred_check_branch
      %292 = sbr.rel (%p289) target = $region56
    $region55: #{dqn3_forward.1} parent=5 // pred_region
      %s293 = ssub.s32 %s15, 1
      %s294 = smul.u32 4, %s20
      %p295 = scmp.lt.s32.totalorder %s294, 7
      %s296 = scalar_select %p295, %s294, 7
      %s297 = smul.addr %s296, 8
      %s298 = scalar_lea.vmem %s0, %s297
      %p299 = pneg %p41
      %p300 = pneg %p38
      %p301 = pneg %p62
      %p302 = pneg %p59
      %p303 = pneg %p83
      %p304 = pneg %p80
      %p305 = pneg %p104
      %p306 = pneg %p101
      %p307 = pneg %p125
      %p308 = pneg %p122
      %p309 = pneg %p146
      %p310 = pneg %p143
      %p311 = pneg %p167
      %p312 = pneg %p164
      %p313 = pneg %p188
      %p314 = pneg %p185
      %p315 = pneg %p209
      %p316 = pneg %p206
      %p317 = pneg %p235
      %p318 = pneg %p232
      %s319 = smul.u32 4, %s20
      %p320 = scmp.lt.s32.totalorder %s319, 7
      %s321 = scalar_select %p320, %s319, 7
      %s322 = smul.addr %s321, 8
      %s323 = scalar_lea.vmem %s9, %s322
      %s324 = smul.u32 4, %s20
      %p325 = scmp.lt.s32.totalorder %s324, 7
      %s326 = scalar_select %p325, %s324, 7
      %s327 = smul.addr %s326, 8
      %s328 = scalar_lea.vmem %s0, %s327
      %s329 = smul.u32 4, %s20
      %s330 = smul.u32 4, %s20
      %p331 = scmp.lt.s32.totalorder %s330, 7
      %s332 = scalar_select %p331, %s330, 7
      %s333 = smul.addr %s332, 8
      %s334 = scalar_lea.vmem %s9, %s333
      %s335 = smul.u32 4, %s20
      %v337 = vld [vmem:[%s328] sm:$0xff]
      %v338 = vld [vmem:[%s328 + $0x8] sm:$0xff]
      %v339 = vld [vmem:[%s328 + $0x10] sm:$0xff]
      %v340 = vld [vmem:[%s328 + $0x18] sm:$0xff]
      %v341 = vpack.c.bf16 %v338, %v337
      %v342 = vpack.c.bf16 %v340, %v339
      %v343 = vld [vmem:[%s1] sm:$0xf]
      %v344 = vld [vmem:[%s1 + $0x4] sm:$0xf]
      %v345 = vld [vmem:[%s1 + $0x8] sm:$0xf]
      %v346 = vld [vmem:[%s1 + $0xc] sm:$0xf]
      %v347 = vld [vmem:[%s2] sm:$0x1]
      %v349 = vperm.slane %v347, 0
      %v355 = vunpack.c.l.b16 %v343
      %v356 = vunpack.c.l.b16 %v344
      %v357 = vunpack.c.l.b16 %v345
      %v358 = vunpack.c.l.b16 %v346
      %v359 = vpack.c.b16 %v356, %v355
      %v360 = vpack.c.b16 %v358, %v357
      %vm363 = vcmask 261120
      %v365 = vsel %vm363, %v341, 0
      %v368 = vsel %vm363, %v342, 0
      %370 = vmatpush.bf16.msra.mxu0 0
      %371 = vmatpush.bf16.msra.mxu0 0
      %372 = vmatpush.bf16.msra.mxu0 0
      %373 = vmatpush.bf16.msra.mxu0 0
      %374 = vmatpush.bf16.msra.mxu0 0
      %375 = vmatpush.bf16.msra.mxu0 0
      %376 = vmatpush.bf16.msra.mxu0 %v360
      %377 = vmatpush.bf16.msra.mxu0 %v359
      %378 = vmatmul.bf16.gmra.mxu0 %v365
      %v379 = vpop.f32.mrf.mxu0
      %v380 = vadd.f32 %v349, %v379
      %v381 = vpop.f32.mrf.mxu0
      %v382 = vadd.f32 %v349, %v381
      %383 = vmatmul.bf16.gmra.mxu0 %v368
      %v384 = vpop.f32.mrf.mxu0
      %v385 = vadd.f32 %v349, %v384
      %v386 = vpop.f32.mrf.mxu0
      %v387 = vadd.f32 %v349, %v386
      %388 = vdwg.mxu0
      %v389 = vmax.f32 %v380, 0.0
      %v390 = vmax.f32 %v382, 0.0
      %v391 = vmax.f32 %v385, 0.0
      %v392 = vmax.f32 %v387, 0.0
      %v393 = vpack.c.bf16 %v390, %v389
      %v394 = vpack.c.bf16 %v392, %v391
      %v395 = vld [vmem:[%s3] sm:$0xff]
      %v396 = vld [vmem:[%s3 + $0x8] sm:$0xff]
      %v397 = vld [vmem:[%s3 + $0x10] sm:$0xff]
      %v398 = vld [vmem:[%s3 + $0x18] sm:$0xff]
      %v399 = vld [vmem:[%s3 + $0x20] sm:$0xff]
      %v400 = vld [vmem:[%s3 + $0x28] sm:$0xff]
      %v401 = vld [vmem:[%s3 + $0x30] sm:$0xff]
      %v402 = vld [vmem:[%s3 + $0x38] sm:$0xff]
      %v403 = vld [vmem:[%s3 + $0x40] sm:$0xff]
      %v404 = vld [vmem:[%s3 + $0x48] sm:$0xff]
      %v405 = vld [vmem:[%s3 + $0x50] sm:$0xff]
      %v406 = vld [vmem:[%s3 + $0x58] sm:$0xff]
      %v407 = vld [vmem:[%s3 + $0x60] sm:$0xff]
      %v408 = vld [vmem:[%s3 + $0x68] sm:$0xff]
      %v409 = vld [vmem:[%s3 + $0x70] sm:$0xff]
      %v410 = vld [vmem:[%s3 + $0x78] sm:$0xff]
      %v411 = vld [vmem:[%s4] sm:$0x3]
      %v413 = vperm.slane %v411, 0
      %v414 = vperm.slane %v411, 1
      %v433 = vunpack.c.l.b16 %v395
      %v434 = vunpack.c.h.b16 %v395
      %v435 = vunpack.c.l.b16 %v396
      %v436 = vunpack.c.h.b16 %v396
      %v437 = vunpack.c.l.b16 %v397
      %v438 = vunpack.c.h.b16 %v397
      %v439 = vunpack.c.l.b16 %v398
      %v440 = vunpack.c.h.b16 %v398
      %v441 = vunpack.c.l.b16 %v399
      %v442 = vunpack.c.h.b16 %v399
      %v443 = vunpack.c.l.b16 %v400
      %v444 = vunpack.c.h.b16 %v400
      %v445 = vunpack.c.l.b16 %v401
      %v446 = vunpack.c.h.b16 %v401
      %v447 = vunpack.c.l.b16 %v402
      %v448 = vunpack.c.h.b16 %v402
      %v449 = vunpack.c.l.b16 %v403
      %v450 = vunpack.c.h.b16 %v403
      %v451 = vunpack.c.l.b16 %v404
      %v452 = vunpack.c.h.b16 %v404
      %v453 = vunpack.c.l.b16 %v405
      %v454 = vunpack.c.h.b16 %v405
      %v455 = vunpack.c.l.b16 %v406
      %v456 = vunpack.c.h.b16 %v406
      %v457 = vunpack.c.l.b16 %v407
      %v458 = vunpack.c.h.b16 %v407
      %v459 = vunpack.c.l.b16 %v408
      %v460 = vunpack.c.h.b16 %v408
      %v461 = vunpack.c.l.b16 %v409
      %v462 = vunpack.c.h.b16 %v409
      %v463 = vunpack.c.l.b16 %v410
      %v464 = vunpack.c.h.b16 %v410
      %v465 = vpack.c.b16 %v435, %v433
      %v466 = vpack.c.b16 %v436, %v434
      %v467 = vpack.c.b16 %v439, %v437
      %v468 = vpack.c.b16 %v440, %v438
      %v469 = vpack.c.b16 %v443, %v441
      %v470 = vpack.c.b16 %v444, %v442
      %v471 = vpack.c.b16 %v447, %v445
      %v472 = vpack.c.b16 %v448, %v446
      %v473 = vpack.c.b16 %v451, %v449
      %v474 = vpack.c.b16 %v452, %v450
      %v475 = vpack.c.b16 %v455, %v453
      %v476 = vpack.c.b16 %v456, %v454
      %v477 = vpack.c.b16 %v459, %v457
      %v478 = vpack.c.b16 %v460, %v458
      %v479 = vpack.c.b16 %v463, %v461
      %v480 = vpack.c.b16 %v464, %v462
      %497 = vmatpush.bf16.msra.mxu0 %v479
      %498 = vmatpush.bf16.msra.mxu0 %v477
      %499 = vmatpush.bf16.msra.mxu0 %v475
      %500 = vmatpush.bf16.msra.mxu0 %v473
      %501 = vmatpush.bf16.msra.mxu0 %v471
      %502 = vmatpush.bf16.msra.mxu0 %v469
      %503 = vmatpush.bf16.msra.mxu0 %v467
      %504 = vmatpush.bf16.msra.mxu0 %v465
      %505 = vmatmul.bf16.gmra.mxu0 %v393
      %v506 = vpop.f32.mrf.mxu0
      %v507 = vadd.f32 %v413, %v506
      %v508 = vpop.f32.mrf.mxu0
      %v509 = vadd.f32 %v413, %v508
      %510 = vmatmul.bf16.gmra.mxu0 %v394
      %v511 = vpop.f32.mrf.mxu0
      %v512 = vadd.f32 %v413, %v511
      %v513 = vpop.f32.mrf.mxu0
      %v514 = vadd.f32 %v413, %v513
      %515 = vdwg.mxu0
      %516 = vmatpush.bf16.msra.mxu0 %v480
      %517 = vmatpush.bf16.msra.mxu0 %v478
      %518 = vmatpush.bf16.msra.mxu0 %v476
      %519 = vmatpush.bf16.msra.mxu0 %v474
      %520 = vmatpush.bf16.msra.mxu0 %v472
      %521 = vmatpush.bf16.msra.mxu0 %v470
      %522 = vmatpush.bf16.msra.mxu0 %v468
      %523 = vmatpush.bf16.msra.mxu0 %v466
      %524 = vmatmul.bf16.gmra.mxu0 %v393
      %v525 = vpop.f32.mrf.mxu0
      %v526 = vadd.f32 %v414, %v525
      %v527 = vpop.f32.mrf.mxu0
      %v528 = vadd.f32 %v414, %v527
      %529 = vmatmul.bf16.gmra.mxu0 %v394
      %v530 = vpop.f32.mrf.mxu0
      %v531 = vadd.f32 %v414, %v530
      %v532 = vpop.f32.mrf.mxu0
      %v533 = vadd.f32 %v414, %v532
      %534 = vdwg.mxu0
      %v535 = vmax.f32 %v507, 0.0
      %v536 = vmax.f32 %v526, 0.0
      %v537 = vmax.f32 %v509, 0.0
      %v538 = vmax.f32 %v528, 0.0
      %v539 = vmax.f32 %v512, 0.0
      %v540 = vmax.f32 %v531, 0.0
      %v541 = vmax.f32 %v514, 0.0
      %v542 = vmax.f32 %v533, 0.0
      %v543 = vld [vmem:[%s5] sm:$0xff]
      %v544 = vld [vmem:[%s5 + $0x8] sm:$0xff]
      %v545 = vld [vmem:[%s5 + $0x10] sm:$0xff]
      %v546 = vld [vmem:[%s5 + $0x18] sm:$0xff]
      %v547 = vld [vmem:[%s5 + $0x20] sm:$0xff]
      %v548 = vld [vmem:[%s5 + $0x28] sm:$0xff]
      %v549 = vld [vmem:[%s5 + $0x30] sm:$0xff]
      %v550 = vld [vmem:[%s5 + $0x38] sm:$0xff]
      %v551 = vld [vmem:[%s5 + $0x40] sm:$0xff]
      %v552 = vld [vmem:[%s5 + $0x48] sm:$0xff]
      %v553 = vld [vmem:[%s5 + $0x50] sm:$0xff]
      %v554 = vld [vmem:[%s5 + $0x58] sm:$0xff]
      %v555 = vld [vmem:[%s5 + $0x60] sm:$0xff]
      %v556 = vld [vmem:[%s5 + $0x68] sm:$0xff]
      %v557 = vld [vmem:[%s5 + $0x70] sm:$0xff]
      %v558 = vld [vmem:[%s5 + $0x78] sm:$0xff]
      %v559 = vld [vmem:[%s5 + $0x80] sm:$0xff]
      %v560 = vld [vmem:[%s5 + $0x88] sm:$0xff]
      %v561 = vld [vmem:[%s5 + $0x90] sm:$0xff]
      %v562 = vld [vmem:[%s5 + $0x98] sm:$0xff]
      %v563 = vld [vmem:[%s5 + $0xa0] sm:$0xff]
      %v564 = vld [vmem:[%s5 + $0xa8] sm:$0xff]
      %v565 = vld [vmem:[%s5 + $0xb0] sm:$0xff]
      %v566 = vld [vmem:[%s5 + $0xb8] sm:$0xff]
      %v567 = vld [vmem:[%s5 + $0xc0] sm:$0xff]
      %v568 = vld [vmem:[%s5 + $0xc8] sm:$0xff]
      %v569 = vld [vmem:[%s5 + $0xd0] sm:$0xff]
      %v570 = vld [vmem:[%s5 + $0xd8] sm:$0xff]
      %v571 = vld [vmem:[%s5 + $0xe0] sm:$0xff]
      %v572 = vld [vmem:[%s5 + $0xe8] sm:$0xff]
      %v573 = vld [vmem:[%s5 + $0xf0] sm:$0xff]
      %v574 = vld [vmem:[%s5 + $0xf8] sm:$0xff]
      %v575 = vld [vmem:[%s6] sm:$0x3]
      %v577 = vperm.slane %v575, 0
      %v578 = vperm.slane %v575, 1
      %v581 = vpack.c.bf16 %v537, %v535
      %v582 = vpack.c.bf16 %v538, %v536
      %v583 = vpack.c.bf16 %v541, %v539
      %v584 = vpack.c.bf16 %v542, %v540
      %v617 = vunpack.c.l.b16 %v543
      %v618 = vunpack.c.h.b16 %v543
      %v619 = vunpack.c.l.b16 %v544
      %v620 = vunpack.c.h.b16 %v544
      %v621 = vunpack.c.l.b16 %v545
      %v622 = vunpack.c.h.b16 %v545
      %v623 = vunpack.c.l.b16 %v546
      %v624 = vunpack.c.h.b16 %v546
      %v625 = vunpack.c.l.b16 %v547
      %v626 = vunpack.c.h.b16 %v547
      %v627 = vunpack.c.l.b16 %v548
      %v628 = vunpack.c.h.b16 %v548
      %v629 = vunpack.c.l.b16 %v549
      %v630 = vunpack.c.h.b16 %v549
      %v631 = vunpack.c.l.b16 %v550
      %v632 = vunpack.c.h.b16 %v550
      %v633 = vunpack.c.l.b16 %v551
      %v634 = vunpack.c.h.b16 %v551
      %v635 = vunpack.c.l.b16 %v552
      %v636 = vunpack.c.h.b16 %v552
      %v637 = vunpack.c.l.b16 %v553
      %v638 = vunpack.c.h.b16 %v553
      %v639 = vunpack.c.l.b16 %v554
      %v640 = vunpack.c.h.b16 %v554
      %v641 = vunpack.c.l.b16 %v555
      %v642 = vunpack.c.h.b16 %v555
      %v643 = vunpack.c.l.b16 %v556
      %v644 = vunpack.c.h.b16 %v556
      %v645 = vunpack.c.l.b16 %v557
      %v646 = vunpack.c.h.b16 %v557
      %v647 = vunpack.c.l.b16 %v558
      %v648 = vunpack.c.h.b16 %v558
      %v649 = vunpack.c.l.b16 %v559
      %v650 = vunpack.c.h.b16 %v559
      %v651 = vunpack.c.l.b16 %v560
      %v652 = vunpack.c.h.b16 %v560
      %v653 = vunpack.c.l.b16 %v561
      %v654 = vunpack.c.h.b16 %v561
      %v655 = vunpack.c.l.b16 %v562
      %v656 = vunpack.c.h.b16 %v562
      %v657 = vunpack.c.l.b16 %v563
      %v658 = vunpack.c.h.b16 %v563
      %v659 = vunpack.c.l.b16 %v564
      %v660 = vunpack.c.h.b16 %v564
      %v661 = vunpack.c.l.b16 %v565
      %v662 = vunpack.c.h.b16 %v565
      %v663 = vunpack.c.l.b16 %v566
      %v664 = vunpack.c.h.b16 %v566
      %v665 = vunpack.c.l.b16 %v567
      %v666 = vunpack.c.h.b16 %v567
      %v667 = vunpack.c.l.b16 %v568
      %v668 = vunpack.c.h.b16 %v568
      %v669 = vunpack.c.l.b16 %v569
      %v670 = vunpack.c.h.b16 %v569
      %v671 = vunpack.c.l.b16 %v570
      %v672 = vunpack.c.h.b16 %v570
      %v673 = vunpack.c.l.b16 %v571
      %v674 = vunpack.c.h.b16 %v571
      %v675 = vunpack.c.l.b16 %v572
      %v676 = vunpack.c.h.b16 %v572
      %v677 = vunpack.c.l.b16 %v573
      %v678 = vunpack.c.h.b16 %v573
      %v679 = vunpack.c.l.b16 %v574
      %v680 = vunpack.c.h.b16 %v574
      %v681 = vpack.c.b16 %v619, %v617
      %v682 = vpack.c.b16 %v620, %v618
      %v683 = vpack.c.b16 %v623, %v621
      %v684 = vpack.c.b16 %v624, %v622
      %v685 = vpack.c.b16 %v627, %v625
      %v686 = vpack.c.b16 %v628, %v626
      %v687 = vpack.c.b16 %v631, %v629
      %v688 = vpack.c.b16 %v632, %v630
      %v689 = vpack.c.b16 %v635, %v633
      %v690 = vpack.c.b16 %v636, %v634
      %v691 = vpack.c.b16 %v639, %v637
      %v692 = vpack.c.b16 %v640, %v638
      %v693 = vpack.c.b16 %v643, %v641
      %v694 = vpack.c.b16 %v644, %v642
      %v695 = vpack.c.b16 %v647, %v645
      %v696 = vpack.c.b16 %v648, %v646
      %v697 = vpack.c.b16 %v651, %v649
      %v698 = vpack.c.b16 %v652, %v650
      %v699 = vpack.c.b16 %v655, %v653
      %v700 = vpack.c.b16 %v656, %v654
      %v701 = vpack.c.b16 %v659, %v657
      %v702 = vpack.c.b16 %v660, %v658
      %v703 = vpack.c.b16 %v663, %v661
      %v704 = vpack.c.b16 %v664, %v662
      %v705 = vpack.c.b16 %v667, %v665
      %v706 = vpack.c.b16 %v668, %v666
      %v707 = vpack.c.b16 %v671, %v669
      %v708 = vpack.c.b16 %v672, %v670
      %v709 = vpack.c.b16 %v675, %v673
      %v710 = vpack.c.b16 %v676, %v674
      %v711 = vpack.c.b16 %v679, %v677
      %v712 = vpack.c.b16 %v680, %v678
      %745 = vmatpush.bf16.msra.mxu0 %v695
      %746 = vmatpush.bf16.msra.mxu0 %v693
      %747 = vmatpush.bf16.msra.mxu0 %v691
      %748 = vmatpush.bf16.msra.mxu0 %v689
      %749 = vmatpush.bf16.msra.mxu0 %v687
      %750 = vmatpush.bf16.msra.mxu0 %v685
      %751 = vmatpush.bf16.msra.mxu0 %v683
      %752 = vmatpush.bf16.msra.mxu0 %v681
      %753 = vmatmul.bf16.gmra.mxu0 %v581
      %v754 = vpop.f32.mrf.mxu0
      %v755 = vadd.f32 %v577, %v754
      %v756 = vpop.f32.mrf.mxu0
      %v757 = vadd.f32 %v577, %v756
      %758 = vmatmul.bf16.gmra.mxu0 %v583
      %v759 = vpop.f32.mrf.mxu0
      %v760 = vadd.f32 %v577, %v759
      %v761 = vpop.f32.mrf.mxu0
      %v762 = vadd.f32 %v577, %v761
      %763 = vdwg.mxu0
      %764 = vmatpush.bf16.msra.mxu0 %v711
      %765 = vmatpush.bf16.msra.mxu0 %v709
      %766 = vmatpush.bf16.msra.mxu0 %v707
      %767 = vmatpush.bf16.msra.mxu0 %v705
      %768 = vmatpush.bf16.msra.mxu0 %v703
      %769 = vmatpush.bf16.msra.mxu0 %v701
      %770 = vmatpush.bf16.msra.mxu0 %v699
      %771 = vmatpush.bf16.msra.mxu0 %v697
      %772 = vmatmul.bf16.gmra.mxu0 %v582
      %v773 = vpop.f32.mrf.mxu0
      %v774 = vadd.f32 %v755, %v773
      %v775 = vpop.f32.mrf.mxu0
      %v776 = vadd.f32 %v757, %v775
      %777 = vmatmul.bf16.gmra.mxu0 %v584
      %v778 = vpop.f32.mrf.mxu0
      %v779 = vadd.f32 %v760, %v778
      %v780 = vpop.f32.mrf.mxu0
      %v781 = vadd.f32 %v762, %v780
      %782 = vdwg.mxu0
      %783 = vmatpush.bf16.msra.mxu0 %v696
      %784 = vmatpush.bf16.msra.mxu0 %v694
      %785 = vmatpush.bf16.msra.mxu0 %v692
      %786 = vmatpush.bf16.msra.mxu0 %v690
      %787 = vmatpush.bf16.msra.mxu0 %v688
      %788 = vmatpush.bf16.msra.mxu0 %v686
      %789 = vmatpush.bf16.msra.mxu0 %v684
      %790 = vmatpush.bf16.msra.mxu0 %v682
      %791 = vmatmul.bf16.gmra.mxu0 %v581
      %v792 = vpop.f32.mrf.mxu0
      %v793 = vadd.f32 %v578, %v792
      %v794 = vpop.f32.mrf.mxu0
      %v795 = vadd.f32 %v578, %v794
      %796 = vmatmul.bf16.gmra.mxu0 %v583
      %v797 = vpop.f32.mrf.mxu0
      %v798 = vadd.f32 %v578, %v797
      %v799 = vpop.f32.mrf.mxu0
      %v800 = vadd.f32 %v578, %v799
      %801 = vdwg.mxu0
      %802 = vmatpush.bf16.msra.mxu0 %v712
      %803 = vmatpush.bf16.msra.mxu0 %v710
      %804 = vmatpush.bf16.msra.mxu0 %v708
      %805 = vmatpush.bf16.msra.mxu0 %v706
      %806 = vmatpush.bf16.msra.mxu0 %v704
      %807 = vmatpush.bf16.msra.mxu0 %v702
      %808 = vmatpush.bf16.msra.mxu0 %v700
      %809 = vmatpush.bf16.msra.mxu0 %v698
      %810 = vmatmul.bf16.gmra.mxu0 %v582
      %v811 = vpop.f32.mrf.mxu0
      %v812 = vadd.f32 %v793, %v811
      %v813 = vpop.f32.mrf.mxu0
      %v814 = vadd.f32 %v795, %v813
      %815 = vmatmul.bf16.gmra.mxu0 %v584
      %v816 = vpop.f32.mrf.mxu0
      %v817 = vadd.f32 %v798, %v816
      %v818 = vpop.f32.mrf.mxu0
      %v819 = vadd.f32 %v800, %v818
      %820 = vdwg.mxu0
      %v821 = vmax.f32 %v774, 0.0
      %v822 = vmax.f32 %v812, 0.0
      %v823 = vmax.f32 %v776, 0.0
      %v824 = vmax.f32 %v814, 0.0
      %v825 = vmax.f32 %v779, 0.0
      %v826 = vmax.f32 %v817, 0.0
      %v827 = vmax.f32 %v781, 0.0
      %v828 = vmax.f32 %v819, 0.0
      %v829 = vpack.c.bf16 %v823, %v821
      %v830 = vpack.c.bf16 %v824, %v822
      %v831 = vpack.c.bf16 %v827, %v825
      %v832 = vpack.c.bf16 %v828, %v826
      %833 = vmatpush.bf16.msra.mxu0 %v695
      %834 = vmatpush.bf16.msra.mxu0 %v693
      %835 = vmatpush.bf16.msra.mxu0 %v691
      %836 = vmatpush.bf16.msra.mxu0 %v689
      %837 = vmatpush.bf16.msra.mxu0 %v687
      %838 = vmatpush.bf16.msra.mxu0 %v685
      %839 = vmatpush.bf16.msra.mxu0 %v683
      %840 = vmatpush.bf16.msra.mxu0 %v681
      %841 = vmatmul.bf16.gmra.mxu0 %v829
      %v842 = vpop.f32.mrf.mxu0
      %v843 = vadd.f32 %v577, %v842
      %v844 = vpop.f32.mrf.mxu0
      %v845 = vadd.f32 %v577, %v844
      %846 = vmatmul.bf16.gmra.mxu0 %v831
      %v847 = vpop.f32.mrf.mxu0
      %v848 = vadd.f32 %v577, %v847
      %v849 = vpop.f32.mrf.mxu0
      %v850 = vadd.f32 %v577, %v849
      %851 = vdwg.mxu0
      %852 = vmatpush.bf16.msra.mxu0 %v711
      %853 = vmatpush.bf16.msra.mxu0 %v709
      %854 = vmatpush.bf16.msra.mxu0 %v707
      %855 = vmatpush.bf16.msra.mxu0 %v705
      %856 = vmatpush.bf16.msra.mxu0 %v703
      %857 = vmatpush.bf16.msra.mxu0 %v701
      %858 = vmatpush.bf16.msra.mxu0 %v699
      %859 = vmatpush.bf16.msra.mxu0 %v697
      %860 = vmatmul.bf16.gmra.mxu0 %v830
      %v861 = vpop.f32.mrf.mxu0
      %v862 = vadd.f32 %v843, %v861
      %v863 = vpop.f32.mrf.mxu0
      %v864 = vadd.f32 %v845, %v863
      %865 = vmatmul.bf16.gmra.mxu0 %v832
      %v866 = vpop.f32.mrf.mxu0
      %v867 = vadd.f32 %v848, %v866
      %v868 = vpop.f32.mrf.mxu0
      %v869 = vadd.f32 %v850, %v868
      %870 = vdwg.mxu0
      %871 = vmatpush.bf16.msra.mxu0 %v696
      %872 = vmatpush.bf16.msra.mxu0 %v694
      %873 = vmatpush.bf16.msra.mxu0 %v692
      %874 = vmatpush.bf16.msra.mxu0 %v690
      %875 = vmatpush.bf16.msra.mxu0 %v688
      %876 = vmatpush.bf16.msra.mxu0 %v686
      %877 = vmatpush.bf16.msra.mxu0 %v684
      %878 = vmatpush.bf16.msra.mxu0 %v682
      %879 = vmatmul.bf16.gmra.mxu0 %v829
      %v880 = vpop.f32.mrf.mxu0
      %v881 = vadd.f32 %v578, %v880
      %v882 = vpop.f32.mrf.mxu0
      %v883 = vadd.f32 %v578, %v882
      %884 = vmatmul.bf16.gmra.mxu0 %v831
      %v885 = vpop.f32.mrf.mxu0
      %v886 = vadd.f32 %v578, %v885
      %v887 = vpop.f32.mrf.mxu0
      %v888 = vadd.f32 %v578, %v887
      %889 = vdwg.mxu0
      %890 = vmatpush.bf16.msra.mxu0 %v712
      %891 = vmatpush.bf16.msra.mxu0 %v710
      %892 = vmatpush.bf16.msra.mxu0 %v708
      %893 = vmatpush.bf16.msra.mxu0 %v706
      %894 = vmatpush.bf16.msra.mxu0 %v704
      %895 = vmatpush.bf16.msra.mxu0 %v702
      %896 = vmatpush.bf16.msra.mxu0 %v700
      %897 = vmatpush.bf16.msra.mxu0 %v698
      %898 = vmatmul.bf16.gmra.mxu0 %v830
      %v899 = vpop.f32.mrf.mxu0
      %v900 = vadd.f32 %v881, %v899
      %v901 = vpop.f32.mrf.mxu0
      %v902 = vadd.f32 %v883, %v901
      %903 = vmatmul.bf16.gmra.mxu0 %v832
      %v904 = vpop.f32.mrf.mxu0
      %v905 = vadd.f32 %v886, %v904
      %v906 = vpop.f32.mrf.mxu0
      %v907 = vadd.f32 %v888, %v906
      %908 = vdwg.mxu0
      %v909 = vmax.f32 %v862, 0.0
      %v910 = vmax.f32 %v900, 0.0
      %v911 = vmax.f32 %v864, 0.0
      %v912 = vmax.f32 %v902, 0.0
      %v913 = vmax.f32 %v867, 0.0
      %v914 = vmax.f32 %v905, 0.0
      %v915 = vmax.f32 %v869, 0.0
      %v916 = vmax.f32 %v907, 0.0
      %v917 = vpack.c.bf16 %v911, %v909
      %v918 = vpack.c.bf16 %v912, %v910
      %v919 = vpack.c.bf16 %v915, %v913
      %v920 = vpack.c.bf16 %v916, %v914
      %921 = vmatpush.bf16.msra.mxu0 %v695
      %922 = vmatpush.bf16.msra.mxu0 %v693
      %923 = vmatpush.bf16.msra.mxu0 %v691
      %924 = vmatpush.bf16.msra.mxu0 %v689
      %925 = vmatpush.bf16.msra.mxu0 %v687
      %926 = vmatpush.bf16.msra.mxu0 %v685
      %927 = vmatpush.bf16.msra.mxu0 %v683
      %928 = vmatpush.bf16.msra.mxu0 %v681
      %929 = vmatmul.bf16.gmra.mxu0 %v917
      %v930 = vpop.f32.mrf.mxu0
      %v931 = vadd.f32 %v577, %v930
      %v932 = vpop.f32.mrf.mxu0
      %v933 = vadd.f32 %v577, %v932
      %934 = vmatmul.bf16.gmra.mxu0 %v919
      %v935 = vpop.f32.mrf.mxu0
      %v936 = vadd.f32 %v577, %v935
      %v937 = vpop.f32.mrf.mxu0
      %v938 = vadd.f32 %v577, %v937
      %939 = vdwg.mxu0
      %940 = vmatpush.bf16.msra.mxu0 %v711
      %941 = vmatpush.bf16.msra.mxu0 %v709
      %942 = vmatpush.bf16.msra.mxu0 %v707
      %943 = vmatpush.bf16.msra.mxu0 %v705
      %944 = vmatpush.bf16.msra.mxu0 %v703
      %945 = vmatpush.bf16.msra.mxu0 %v701
      %946 = vmatpush.bf16.msra.mxu0 %v699
      %947 = vmatpush.bf16.msra.mxu0 %v697
      %948 = vmatmul.bf16.gmra.mxu0 %v918
      %v949 = vpop.f32.mrf.mxu0
      %v950 = vadd.f32 %v931, %v949
      %v951 = vpop.f32.mrf.mxu0
      %v952 = vadd.f32 %v933, %v951
      %953 = vmatmul.bf16.gmra.mxu0 %v920
      %v954 = vpop.f32.mrf.mxu0
      %v955 = vadd.f32 %v936, %v954
      %v956 = vpop.f32.mrf.mxu0
      %v957 = vadd.f32 %v938, %v956
      %958 = vdwg.mxu0
      %959 = vmatpush.bf16.msra.mxu0 %v696
      %960 = vmatpush.bf16.msra.mxu0 %v694
      %961 = vmatpush.bf16.msra.mxu0 %v692
      %962 = vmatpush.bf16.msra.mxu0 %v690
      %963 = vmatpush.bf16.msra.mxu0 %v688
      %964 = vmatpush.bf16.msra.mxu0 %v686
      %965 = vmatpush.bf16.msra.mxu0 %v684
      %966 = vmatpush.bf16.msra.mxu0 %v682
      %967 = vmatmul.bf16.gmra.mxu0 %v917
      %v968 = vpop.f32.mrf.mxu0
      %v969 = vadd.f32 %v578, %v968
      %v970 = vpop.f32.mrf.mxu0
      %v971 = vadd.f32 %v578, %v970
      %972 = vmatmul.bf16.gmra.mxu0 %v919
      %v973 = vpop.f32.mrf.mxu0
      %v974 = vadd.f32 %v578, %v973
      %v975 = vpop.f32.mrf.mxu0
      %v976 = vadd.f32 %v578, %v975
      %977 = vdwg.mxu0
      %978 = vmatpush.bf16.msra.mxu0 %v712
      %979 = vmatpush.bf16.msra.mxu0 %v710
      %980 = vmatpush.bf16.msra.mxu0 %v708
      %981 = vmatpush.bf16.msra.mxu0 %v706
      %982 = vmatpush.bf16.msra.mxu0 %v704
      %983 = vmatpush.bf16.msra.mxu0 %v702
      %984 = vmatpush.bf16.msra.mxu0 %v700
      %985 = vmatpush.bf16.msra.mxu0 %v698
      %986 = vmatmul.bf16.gmra.mxu0 %v918
      %v987 = vpop.f32.mrf.mxu0
      %v988 = vadd.f32 %v969, %v987
      %v989 = vpop.f32.mrf.mxu0
      %v990 = vadd.f32 %v971, %v989
      %991 = vmatmul.bf16.gmra.mxu0 %v920
      %v992 = vpop.f32.mrf.mxu0
      %v993 = vadd.f32 %v974, %v992
      %v994 = vpop.f32.mrf.mxu0
      %v995 = vadd.f32 %v976, %v994
      %996 = vdwg.mxu0
      %v997 = vmax.f32 %v950, 0.0
      %v998 = vmax.f32 %v988, 0.0
      %v999 = vmax.f32 %v952, 0.0
      %v1000 = vmax.f32 %v990, 0.0
      %v1001 = vmax.f32 %v955, 0.0
      %v1002 = vmax.f32 %v993, 0.0
      %v1003 = vmax.f32 %v957, 0.0
      %v1004 = vmax.f32 %v995, 0.0
      %v1005 = vpack.c.bf16 %v999, %v997
      %v1006 = vpack.c.bf16 %v1000, %v998
      %v1007 = vpack.c.bf16 %v1003, %v1001
      %v1008 = vpack.c.bf16 %v1004, %v1002
      %1009 = vmatpush.bf16.msra.mxu0 %v695
      %1010 = vmatpush.bf16.msra.mxu0 %v693
      %1011 = vmatpush.bf16.msra.mxu0 %v691
      %1012 = vmatpush.bf16.msra.mxu0 %v689
      %1013 = vmatpush.bf16.msra.mxu0 %v687
      %1014 = vmatpush.bf16.msra.mxu0 %v685
      %1015 = vmatpush.bf16.msra.mxu0 %v683
      %1016 = vmatpush.bf16.msra.mxu0 %v681
      %1017 = vmatmul.bf16.gmra.mxu0 %v1005
      %v1018 = vpop.f32.mrf.mxu0
      %v1019 = vadd.f32 %v577, %v1018
      %v1020 = vpop.f32.mrf.mxu0
      %v1021 = vadd.f32 %v577, %v1020
      %1022 = vmatmul.bf16.gmra.mxu0 %v1007
      %v1023 = vpop.f32.mrf.mxu0
      %v1024 = vadd.f32 %v577, %v1023
      %v1025 = vpop.f32.mrf.mxu0
      %v1026 = vadd.f32 %v577, %v1025
      %1027 = vdwg.mxu0
      %1028 = vmatpush.bf16.msra.mxu0 %v711
      %1029 = vmatpush.bf16.msra.mxu0 %v709
      %1030 = vmatpush.bf16.msra.mxu0 %v707
      %1031 = vmatpush.bf16.msra.mxu0 %v705
      %1032 = vmatpush.bf16.msra.mxu0 %v703
      %1033 = vmatpush.bf16.msra.mxu0 %v701
      %1034 = vmatpush.bf16.msra.mxu0 %v699
      %1035 = vmatpush.bf16.msra.mxu0 %v697
      %1036 = vmatmul.bf16.gmra.mxu0 %v1006
      %v1037 = vpop.f32.mrf.mxu0
      %v1038 = vadd.f32 %v1019, %v1037
      %v1039 = vpop.f32.mrf.mxu0
      %v1040 = vadd.f32 %v1021, %v1039
      %1041 = vmatmul.bf16.gmra.mxu0 %v1008
      %v1042 = vpop.f32.mrf.mxu0
      %v1043 = vadd.f32 %v1024, %v1042
      %v1044 = vpop.f32.mrf.mxu0
      %v1045 = vadd.f32 %v1026, %v1044
      %1046 = vdwg.mxu0
      %1047 = vmatpush.bf16.msra.mxu0 %v696
      %1048 = vmatpush.bf16.msra.mxu0 %v694
      %1049 = vmatpush.bf16.msra.mxu0 %v692
      %1050 = vmatpush.bf16.msra.mxu0 %v690
      %1051 = vmatpush.bf16.msra.mxu0 %v688
      %1052 = vmatpush.bf16.msra.mxu0 %v686
      %1053 = vmatpush.bf16.msra.mxu0 %v684
      %1054 = vmatpush.bf16.msra.mxu0 %v682
      %1055 = vmatmul.bf16.gmra.mxu0 %v1005
      %v1056 = vpop.f32.mrf.mxu0
      %v1057 = vadd.f32 %v578, %v1056
      %v1058 = vpop.f32.mrf.mxu0
      %v1059 = vadd.f32 %v578, %v1058
      %1060 = vmatmul.bf16.gmra.mxu0 %v1007
      %v1061 = vpop.f32.mrf.mxu0
      %v1062 = vadd.f32 %v578, %v1061
      %v1063 = vpop.f32.mrf.mxu0
      %v1064 = vadd.f32 %v578, %v1063
      %1065 = vdwg.mxu0
      %1066 = vmatpush.bf16.msra.mxu0 %v712
      %1067 = vmatpush.bf16.msra.mxu0 %v710
      %1068 = vmatpush.bf16.msra.mxu0 %v708
      %1069 = vmatpush.bf16.msra.mxu0 %v706
      %1070 = vmatpush.bf16.msra.mxu0 %v704
      %1071 = vmatpush.bf16.msra.mxu0 %v702
      %1072 = vmatpush.bf16.msra.mxu0 %v700
      %1073 = vmatpush.bf16.msra.mxu0 %v698
      %1074 = vmatmul.bf16.gmra.mxu0 %v1006
      %v1075 = vpop.f32.mrf.mxu0
      %v1076 = vadd.f32 %v1057, %v1075
      %v1077 = vpop.f32.mrf.mxu0
      %v1078 = vadd.f32 %v1059, %v1077
      %1079 = vmatmul.bf16.gmra.mxu0 %v1008
      %v1080 = vpop.f32.mrf.mxu0
      %v1081 = vadd.f32 %v1062, %v1080
      %v1082 = vpop.f32.mrf.mxu0
      %v1083 = vadd.f32 %v1064, %v1082
      %1084 = vdwg.mxu0
      %v1085 = vmax.f32 %v1038, 0.0
      %v1086 = vmax.f32 %v1076, 0.0
      %v1087 = vmax.f32 %v1040, 0.0
      %v1088 = vmax.f32 %v1078, 0.0
      %v1089 = vmax.f32 %v1043, 0.0
      %v1090 = vmax.f32 %v1081, 0.0
      %v1091 = vmax.f32 %v1045, 0.0
      %v1092 = vmax.f32 %v1083, 0.0
      %v1093 = vpack.c.bf16 %v1087, %v1085
      %v1094 = vpack.c.bf16 %v1088, %v1086
      %v1095 = vpack.c.bf16 %v1091, %v1089
      %v1096 = vpack.c.bf16 %v1092, %v1090
      %1097 = vmatpush.bf16.msra.mxu0 %v695
      %1098 = vmatpush.bf16.msra.mxu0 %v693
      %1099 = vmatpush.bf16.msra.mxu0 %v691
      %1100 = vmatpush.bf16.msra.mxu0 %v689
      %1101 = vmatpush.bf16.msra.mxu0 %v687
      %1102 = vmatpush.bf16.msra.mxu0 %v685
      %1103 = vmatpush.bf16.msra.mxu0 %v683
      %1104 = vmatpush.bf16.msra.mxu0 %v681
      %1105 = vmatmul.bf16.gmra.mxu0 %v1093
      %v1106 = vpop.f32.mrf.mxu0
      %v1107 = vadd.f32 %v577, %v1106
      %v1108 = vpop.f32.mrf.mxu0
      %v1109 = vadd.f32 %v577, %v1108
      %1110 = vmatmul.bf16.gmra.mxu0 %v1095
      %v1111 = vpop.f32.mrf.mxu0
      %v1112 = vadd.f32 %v577, %v1111
      %v1113 = vpop.f32.mrf.mxu0
      %v1114 = vadd.f32 %v577, %v1113
      %1115 = vdwg.mxu0
      %1116 = vmatpush.bf16.msra.mxu0 %v711
      %1117 = vmatpush.bf16.msra.mxu0 %v709
      %1118 = vmatpush.bf16.msra.mxu0 %v707
      %1119 = vmatpush.bf16.msra.mxu0 %v705
      %1120 = vmatpush.bf16.msra.mxu0 %v703
      %1121 = vmatpush.bf16.msra.mxu0 %v701
      %1122 = vmatpush.bf16.msra.mxu0 %v699
      %1123 = vmatpush.bf16.msra.mxu0 %v697
      %1124 = vmatmul.bf16.gmra.mxu0 %v1094
      %v1125 = vpop.f32.mrf.mxu0
      %v1126 = vadd.f32 %v1107, %v1125
      %v1127 = vpop.f32.mrf.mxu0
      %v1128 = vadd.f32 %v1109, %v1127
      %1129 = vmatmul.bf16.gmra.mxu0 %v1096
      %v1130 = vpop.f32.mrf.mxu0
      %v1131 = vadd.f32 %v1112, %v1130
      %v1132 = vpop.f32.mrf.mxu0
      %v1133 = vadd.f32 %v1114, %v1132
      %1134 = vdwg.mxu0
      %1135 = vmatpush.bf16.msra.mxu0 %v696
      %1136 = vmatpush.bf16.msra.mxu0 %v694
      %1137 = vmatpush.bf16.msra.mxu0 %v692
      %1138 = vmatpush.bf16.msra.mxu0 %v690
      %1139 = vmatpush.bf16.msra.mxu0 %v688
      %1140 = vmatpush.bf16.msra.mxu0 %v686
      %1141 = vmatpush.bf16.msra.mxu0 %v684
      %1142 = vmatpush.bf16.msra.mxu0 %v682
      %1143 = vmatmul.bf16.gmra.mxu0 %v1093
      %v1144 = vpop.f32.mrf.mxu0
      %v1145 = vadd.f32 %v578, %v1144
      %v1146 = vpop.f32.mrf.mxu0
      %v1147 = vadd.f32 %v578, %v1146
      %1148 = vmatmul.bf16.gmra.mxu0 %v1095
      %v1149 = vpop.f32.mrf.mxu0
      %v1150 = vadd.f32 %v578, %v1149
      %v1151 = vpop.f32.mrf.mxu0
      %v1152 = vadd.f32 %v578, %v1151
      %1153 = vdwg.mxu0
      %1154 = vmatpush.bf16.msra.mxu0 %v712
      %1155 = vmatpush.bf16.msra.mxu0 %v710
      %1156 = vmatpush.bf16.msra.mxu0 %v708
      %1157 = vmatpush.bf16.msra.mxu0 %v706
      %1158 = vmatpush.bf16.msra.mxu0 %v704
      %1159 = vmatpush.bf16.msra.mxu0 %v702
      %1160 = vmatpush.bf16.msra.mxu0 %v700
      %1161 = vmatpush.bf16.msra.mxu0 %v698
      %1162 = vmatmul.bf16.gmra.mxu0 %v1094
      %v1163 = vpop.f32.mrf.mxu0
      %v1164 = vadd.f32 %v1145, %v1163
      %v1165 = vpop.f32.mrf.mxu0
      %v1166 = vadd.f32 %v1147, %v1165
      %1167 = vmatmul.bf16.gmra.mxu0 %v1096
      %v1168 = vpop.f32.mrf.mxu0
      %v1169 = vadd.f32 %v1150, %v1168
      %v1170 = vpop.f32.mrf.mxu0
      %v1171 = vadd.f32 %v1152, %v1170
      %1172 = vdwg.mxu0
      %v1173 = vmax.f32 %v1126, 0.0
      %v1174 = vmax.f32 %v1164, 0.0
      %v1175 = vmax.f32 %v1128, 0.0
      %v1176 = vmax.f32 %v1166, 0.0
      %v1177 = vmax.f32 %v1131, 0.0
      %v1178 = vmax.f32 %v1169, 0.0
      %v1179 = vmax.f32 %v1133, 0.0
      %v1180 = vmax.f32 %v1171, 0.0
      %v1181 = vpack.c.bf16 %v1175, %v1173
      %v1182 = vpack.c.bf16 %v1176, %v1174
      %v1183 = vpack.c.bf16 %v1179, %v1177
      %v1184 = vpack.c.bf16 %v1180, %v1178
      %v1185 = vld [vmem:[%s7] sm:$0xf]
      %v1186 = vld [vmem:[%s7 + $0x4] sm:$0xf]
      %v1187 = vld [vmem:[%s7 + $0x8] sm:$0xf]
      %v1188 = vld [vmem:[%s7 + $0xc] sm:$0xf]
      %v1189 = vld [vmem:[%s7 + $0x10] sm:$0xf]
      %v1190 = vld [vmem:[%s7 + $0x14] sm:$0xf]
      %v1191 = vld [vmem:[%s7 + $0x18] sm:$0xf]
      %v1192 = vld [vmem:[%s7 + $0x1c] sm:$0xf]
      %v1193 = vld [vmem:[%s7 + $0x20] sm:$0xf]
      %v1194 = vld [vmem:[%s7 + $0x24] sm:$0xf]
      %v1195 = vld [vmem:[%s7 + $0x28] sm:$0xf]
      %v1196 = vld [vmem:[%s7 + $0x2c] sm:$0xf]
      %v1197 = vld [vmem:[%s7 + $0x30] sm:$0xf]
      %v1198 = vld [vmem:[%s7 + $0x34] sm:$0xf]
      %v1199 = vld [vmem:[%s7 + $0x38] sm:$0xf]
      %v1200 = vld [vmem:[%s7 + $0x3c] sm:$0xf]
      %v1201 = vld [vmem:[%s7 + $0x40] sm:$0xf]
      %v1202 = vld [vmem:[%s7 + $0x44] sm:$0xf]
      %v1203 = vld [vmem:[%s7 + $0x48] sm:$0xf]
      %v1204 = vld [vmem:[%s7 + $0x4c] sm:$0xf]
      %v1205 = vld [vmem:[%s7 + $0x50] sm:$0xf]
      %v1206 = vld [vmem:[%s7 + $0x54] sm:$0xf]
      %v1207 = vld [vmem:[%s7 + $0x58] sm:$0xf]
      %v1208 = vld [vmem:[%s7 + $0x5c] sm:$0xf]
      %v1209 = vld [vmem:[%s7 + $0x60] sm:$0xf]
      %v1210 = vld [vmem:[%s7 + $0x64] sm:$0xf]
      %v1211 = vld [vmem:[%s7 + $0x68] sm:$0xf]
      %v1212 = vld [vmem:[%s7 + $0x6c] sm:$0xf]
      %v1213 = vld [vmem:[%s7 + $0x70] sm:$0xf]
      %v1214 = vld [vmem:[%s7 + $0x74] sm:$0xf]
      %v1215 = vld [vmem:[%s7 + $0x78] sm:$0xf]
      %v1216 = vld [vmem:[%s7 + $0x7c] sm:$0xf]
      %v1217 = vld [vmem:[%s8] sm:$0x1]
      %v1219 = vperm.slane %v1217, 0
      %v1253 = vunpack.c.l.b16 %v1185
      %v1254 = vunpack.c.l.b16 %v1186
      %v1255 = vunpack.c.l.b16 %v1187
      %v1256 = vunpack.c.l.b16 %v1188
      %v1257 = vunpack.c.l.b16 %v1189
      %v1258 = vunpack.c.l.b16 %v1190
      %v1259 = vunpack.c.l.b16 %v1191
      %v1260 = vunpack.c.l.b16 %v1192
      %v1261 = vunpack.c.l.b16 %v1193
      %v1262 = vunpack.c.l.b16 %v1194
      %v1263 = vunpack.c.l.b16 %v1195
      %v1264 = vunpack.c.l.b16 %v1196
      %v1265 = vunpack.c.l.b16 %v1197
      %v1266 = vunpack.c.l.b16 %v1198
      %v1267 = vunpack.c.l.b16 %v1199
      %v1268 = vunpack.c.l.b16 %v1200
      %v1269 = vunpack.c.l.b16 %v1201
      %v1270 = vunpack.c.l.b16 %v1202
      %v1271 = vunpack.c.l.b16 %v1203
      %v1272 = vunpack.c.l.b16 %v1204
      %v1273 = vunpack.c.l.b16 %v1205
      %v1274 = vunpack.c.l.b16 %v1206
      %v1275 = vunpack.c.l.b16 %v1207
      %v1276 = vunpack.c.l.b16 %v1208
      %v1277 = vunpack.c.l.b16 %v1209
      %v1278 = vunpack.c.l.b16 %v1210
      %v1279 = vunpack.c.l.b16 %v1211
      %v1280 = vunpack.c.l.b16 %v1212
      %v1281 = vunpack.c.l.b16 %v1213
      %v1282 = vunpack.c.l.b16 %v1214
      %v1283 = vunpack.c.l.b16 %v1215
      %v1284 = vunpack.c.l.b16 %v1216
      %v1285 = vpack.c.b16 %v1254, %v1253
      %v1286 = vpack.c.b16 %v1256, %v1255
      %v1287 = vpack.c.b16 %v1258, %v1257
      %v1288 = vpack.c.b16 %v1260, %v1259
      %v1289 = vpack.c.b16 %v1262, %v1261
      %v1290 = vpack.c.b16 %v1264, %v1263
      %v1291 = vpack.c.b16 %v1266, %v1265
      %v1292 = vpack.c.b16 %v1268, %v1267
      %v1293 = vpack.c.b16 %v1270, %v1269
      %v1294 = vpack.c.b16 %v1272, %v1271
      %v1295 = vpack.c.b16 %v1274, %v1273
      %v1296 = vpack.c.b16 %v1276, %v1275
      %v1297 = vpack.c.b16 %v1278, %v1277
      %v1298 = vpack.c.b16 %v1280, %v1279
      %v1299 = vpack.c.b16 %v1282, %v1281
      %v1300 = vpack.c.b16 %v1284, %v1283
      %1317 = vmatpush.bf16.msra.mxu0 %v1292
      %1318 = vmatpush.bf16.msra.mxu0 %v1291
      %1319 = vmatpush.bf16.msra.mxu0 %v1290
      %1320 = vmatpush.bf16.msra.mxu0 %v1289
      %1321 = vmatpush.bf16.msra.mxu0 %v1288
      %1322 = vmatpush.bf16.msra.mxu0 %v1287
      %1323 = vmatpush.bf16.msra.mxu0 %v1286
      %1324 = vmatpush.bf16.msra.mxu0 %v1285
      %1325 = vmatmul.bf16.gmra.mxu0 %v1181
      %v1326 = vpop.f32.mrf.mxu0
      %v1327 = vadd.f32 %v1219, %v1326
      %v1328 = vpop.f32.mrf.mxu0
      %v1329 = vadd.f32 %v1219, %v1328
      %1330 = vmatmul.bf16.gmra.mxu0 %v1183
      %v1331 = vpop.f32.mrf.mxu0
      %v1332 = vadd.f32 %v1219, %v1331
      %v1333 = vpop.f32.mrf.mxu0
      %v1334 = vadd.f32 %v1219, %v1333
      %1335 = vdwg.mxu0
      %1336 = vmatpush.bf16.msra.mxu0 %v1300
      %1337 = vmatpush.bf16.msra.mxu0 %v1299
      %1338 = vmatpush.bf16.msra.mxu0 %v1298
      %1339 = vmatpush.bf16.msra.mxu0 %v1297
      %1340 = vmatpush.bf16.msra.mxu0 %v1296
      %1341 = vmatpush.bf16.msra.mxu0 %v1295
      %1342 = vmatpush.bf16.msra.mxu0 %v1294
      %1343 = vmatpush.bf16.msra.mxu0 %v1293
      %1344 = vmatmul.bf16.gmra.mxu0 %v1182
      %v1345 = vpop.f32.mrf.mxu0
      %v1346 = vadd.f32 %v1327, %v1345
      %v1347 = vpop.f32.mrf.mxu0
      %v1348 = vadd.f32 %v1329, %v1347
      %1349 = vmatmul.bf16.gmra.mxu0 %v1184
      %v1350 = vpop.f32.mrf.mxu0
      %v1351 = vadd.f32 %v1332, %v1350
      %v1352 = vpop.f32.mrf.mxu0
      %v1353 = vadd.f32 %v1334, %v1352
      %1354 = vdwg.mxu0
      %vm1355 = vcmask 64512
      %1356 = vst.msk [vmem:[%s334] sm:$0xff] %vm1355, %v1346
      %1357 = vst.msk [vmem:[%s334 + $0x8] sm:$0xff] %vm1355, %v1348
      %1358 = vst.msk [vmem:[%s334 + $0x10] sm:$0xff] %vm1355, %v1351
      %1359 = vst.msk [vmem:[%s334 + $0x18] sm:$0xff] %vm1355, %v1353
      %s1360 = smul.u32 4, %s20
      %p1361 = scmp.lt.s32.totalorder %s1360, 7
      %s1362 = scalar_select %p1361, %s1360, 7
      %s1363 = smul.addr %s1362, 8
      %s1364 = scalar_lea.vmem %s9, %s1363
      // Predicated region
      $region57: #{dqn3_forward.1} parent=55 // pred_check
        %p1365 = pneg %p232
      $region58: #{dqn3_forward.1} parent=55 // pred_check_branch
        %1367 = sbr.rel (%p1365) target = $region60
      $region59: #{dqn3_forward.1} parent=55 // pred_region
        %s1368 = smul.u32 4, %s20
      $region60: #{dqn3_forward.1} parent=55 // pred_fallthru
        _
    $region56: #{dqn3_forward.1} parent=5 // pred_fallthru
      _
    %p1369 = scmp.le.s32.totalorder 2, %s15
    // Predicated region
    $region61: #{dqn3_forward.1} parent=5 // pred_check
      %p1370 = pneg %p1369
    $region62: #{dqn3_forward.1} parent=5 // pred_check_branch
      %1372 = sbr.rel (%p1370) target = $region64
    $region63: #{dqn3_forward.1} parent=5 // pred_region
      %s1373 = ssub.s32 %s15, 2
      // Predicated region
      $region65: #{dqn3_forward.1} parent=63 // pred_check
        %p1374 = pneg %p238
      $region66: #{dqn3_forward.1} parent=63 // pred_check_branch
        %1376 = sbr.rel (%p1374) target = $region68
      $region67: #{dqn3_forward.1} parent=63 // pred_region
        %s1377 = smul.u32 4, %s21
        %p1378 = scmp.lt.s32.totalorder %s1377, 7
        %s1379 = scalar_select %p1378, %s1377, 7
        %s1380 = smul.addr %s1379, 8
        %s1381 = scalar_lea.vmem %s9, %s1380
      $region68: #{dqn3_forward.1} parent=63 // pred_fallthru
        _
    $region64: #{dqn3_forward.1} parent=5 // pred_fallthru
      _
  $region6: #{dqn3_forward.1} parent=0 // loop_footer
    %s19 = sadd.s32 1, %s15
  $region7: #{dqn3_forward.1} parent=0 // loop_footer_branch
    %14 = sbr.rel target = $region3
  $region8: #{dqn3_forward.1} parent=0 // loop_exit
    _

</llo_original>
